<compile_context>
chip_gen: v6e
topology: v6e:2x2x1
jax: 0.10.0
libtpu: 0.0.40
codegen_flags: <defaults>
</compile_context>

<pallas_src>
import jax
import jax.numpy as jnp
from jax.experimental import pallas as pl
from jax.experimental.pallas import tpu as pltpu


def _fourier_kernel(x_ref, w_ref, o_ref):
    # x_ref: (bm, 2)   f32 coordinates
    # w_ref: (2, F)    f32 raw parameter b (units: "turns"; 2*pi NOT folded in)
    # o_ref: (bm, 2F)  output, [:, :F] = sin, [:, F:] = cos
    x = x_ref[...]
    x0 = x[:, 0:1]                              # (bm, 1)
    x1 = x[:, 1:2]                              # (bm, 1)

    # Projection in turns: t = x . b  (two VPU broadcast FMAs over F lanes).
    t = x0 * w_ref[0:1, :] + x1 * w_ref[1:2, :]               # (bm, F)

    # Exact period-1 range reduction (in turns): r in ~[-0.5, 0.5].
    r = t - jnp.floor(t + 0.5)
    u = jnp.float32(jnp.pi) * r                                # u in [-pi/2, pi/2]
    u2 = u * u

    # Short Taylor polynomials on the reduced range (|err| < 4e-6).
    s = u * (1.0 + u2 * (-1.0 / 6.0
             + u2 * (1.0 / 120.0
             + u2 * (-1.0 / 5040.0
             + u2 * (1.0 / 362880.0)))))                        # sin(pi*r)
    c = 1.0 + u2 * (-0.5
        + u2 * (1.0 / 24.0
        + u2 * (-1.0 / 720.0
        + u2 * (1.0 / 40320.0
        + u2 * (-1.0 / 3628800.0)))))                           # cos(pi*r)

    # Double-angle: sin(2*pi*t) and cos(2*pi*t).
    sin_o = (2.0 * s) * c
    cos_o = (c - s) * (c + s)

    f = w_ref.shape[1]
    o_ref[:, :f] = sin_o.astype(o_ref.dtype)
    o_ref[:, f:] = cos_o.astype(o_ref.dtype)


def fourier_forward(x, b, *, bm=1024, out_dtype=None):
    """x: (B, 2), b: (2, nfeat)  ->  (B, 2*nfeat) = [sin(2*pi*x@b), cos(2*pi*x@b)].

    out_dtype=jnp.bfloat16 halves HBM writeback (compute stays f32).
    nfeat % 128 == 0 gives fully unmasked, lane-dense stores (fastest path).
    """
    B, C = x.shape
    assert C == 2, "Fourier module expects 2-D input coordinates"
    _, nfeat = b.shape
    out_dtype = out_dtype or x.dtype

    x = x.astype(jnp.float32)
    b = b.astype(jnp.float32)   # raw b; the 2*pi lives in the kernel's reduction

    lane_w = 2 * nfeat
    out_itemsize = jnp.dtype(out_dtype).itemsize

    # VMEM budget: keep the double-buffered output tile (plus the tiny x tile)
    # around <= 8 MiB -> safely inside the default scoped VMEM on v5e/v6e/v7x.
    bytes_per_row = lane_w * out_itemsize * 2 + 2 * 4 * 2
    bm_cap = max(8, ((8 * 1024 * 1024) // max(bytes_per_row, 1)) // 8 * 8)
    bm_eff = max(8, (min(bm, bm_cap) // 8) * 8)

    if B >= 128:
        # v7x has 2 TensorCores: ensure the "parallel" batch axis has >= 2-4
        # grid steps so both cores get work (neutral on v5e/v6e).
        per_step = ((pl.cdiv(B, 4) + 7) // 8) * 8
        bm_eff = min(bm_eff, max(64, per_step))
    else:
        bm_eff = min(bm_eff, ((B + 7) // 8) * 8)

    B_pad = pl.cdiv(B, bm_eff) * bm_eff
    if B_pad != B:
        x = jnp.pad(x, ((0, B_pad - B), (0, 0)))

    grid = (B_pad // bm_eff,)

    out = pl.pallas_call(
        _fourier_kernel,
        out_shape=jax.ShapeDtypeStruct((B_pad, lane_w), out_dtype),
        grid_spec=pltpu.PrefetchScalarGridSpec(
            num_scalar_prefetch=0,
            grid=grid,
            in_specs=[
                # x tile: (bm, 2) — last dim equals the full array dim, OK.
                pl.BlockSpec((bm_eff, 2), lambda i: (i, 0)),
                # Small constant parameter: whole array every step.
                pl.BlockSpec((2, nfeat), lambda i: (0, 0)),
            ],
            out_specs=pl.BlockSpec((bm_eff, lane_w), lambda i: (i, 0)),
        ),
        compiler_params=pltpu.CompilerParams(
            dimension_semantics=("parallel",)),
    )(x, b)

    if B_pad != B:
        out = out[:B]
    return out


def fourier_reference(x, b):
    proj = jnp.einsum('bc,cf->bf', 2.0 * jnp.float32(jnp.pi) * x, b)
    return jnp.concatenate([jnp.sin(proj), jnp.cos(proj)], axis=-1)


if __name__ == "__main__":
    key = jax.random.PRNGKey(0)
    kb, kx = jax.random.split(key)
    scale = 10.0

    # Primary config: nfeat a multiple of 128 -> fully unmasked half-stores.
    nfeat, B = 128, 256
    b = jax.random.normal(kb, (2, nfeat), dtype=jnp.float32) * scale
    x = jax.random.uniform(kx, (B, 2), dtype=jnp.float32)

    out = jax.block_until_ready(fourier_forward(x, b))
    ref = fourier_reference(x, b)
    assert out.shape == (B, 2 * nfeat)
    # atol covers f32 rounding of the large argument 2*pi*x@b (reference and
    # kernel form it slightly differently); kernel poly error itself is <1e-5.
    assert jnp.allclose(out, ref, atol=1e-3), \
        f"max err {jnp.max(jnp.abs(out - ref))}"

    # Misaligned nfeat path: halves written at true offsets (masked stores),
    # no extra XLA concatenate pass over the output.
    nfeat2, B2 = 48, 40
    b2 = jax.random.normal(kb, (2, nfeat2), dtype=jnp.float32) * scale
    x2 = jax.random.uniform(kx, (B2, 2), dtype=jnp.float32)
    out2 = jax.block_until_ready(fourier_forward(x2, b2))
    ref2 = fourier_reference(x2, b2)
    assert out2.shape == (B2, 2 * nfeat2)
    assert jnp.allclose(out2, ref2, atol=1e-3), \
        f"max err {jnp.max(jnp.abs(out2 - ref2))}"

    # bf16 output option (v5e writeback relief); compute stays f32.
    out_bf16 = jax.block_until_ready(
        fourier_forward(x, b, out_dtype=jnp.bfloat16))
    assert jnp.allclose(out_bf16.astype(jnp.float32), ref, atol=2e-2), \
        f"max err {jnp.max(jnp.abs(out_bf16.astype(jnp.float32) - ref))}"

    print("KERNEL_OK")
</pallas_src>

<mosaic_0001>
module attributes {stable_mosaic.version = 11 : i64} {
  func.func @_fourier_kernel(%arg0: i32, %arg1: memref<64x2xf32, #tpu.memory_space<vmem>>, %arg2: memref<2x128xf32, #tpu.memory_space<vmem>>, %arg3: memref<64x256xf32, #tpu.memory_space<vmem>>) attributes {dimension_semantics = [#tpu.dimension_semantics<parallel>], iteration_bounds = array<i64: 4>, scalar_prefetch = 0 : i64, scratch_operands = 0 : i64, tpu.core_type = #tpu.core_type<tc>, window_params = [{transform_indices = @transform_0, window_bounds = array<i64: 64, 2>}, {pipeline_mode = #tpu.pipeline_mode<synchronous>, transform_indices = @transform_1, window_bounds = array<i64: 2, 128>}, {transform_indices = @transform_2, window_bounds = array<i64: 64, 256>}]} {
    %c0 = arith.constant 0 : index
    %c0_0 = arith.constant 0 : index
    %0 = vector.load %arg1[%c0, %c0_0] : memref<64x2xf32, #tpu.memory_space<vmem>>, vector<64x2xf32>
    %1 = vector.extract_strided_slice %0 {offsets = [0, 0], sizes = [64, 1], strides = [1, 1]} : vector<64x2xf32> to vector<64x1xf32>
    %2 = vector.extract_strided_slice %0 {offsets = [0, 1], sizes = [64, 1], strides = [1, 1]} : vector<64x2xf32> to vector<64x1xf32>
    %c0_1 = arith.constant 0 : index
    %c0_2 = arith.constant 0 : index
    %3 = vector.load %arg2[%c0_1, %c0_2] : memref<2x128xf32, #tpu.memory_space<vmem>>, vector<1x128xf32>
    %4 = vector.broadcast %1 : vector<64x1xf32> to vector<64x128xf32>
    %5 = vector.broadcast %3 : vector<1x128xf32> to vector<64x128xf32>
    %6 = arith.mulf %4, %5 : vector<64x128xf32>
    %c1 = arith.constant 1 : index
    %c0_3 = arith.constant 0 : index
    %7 = vector.load %arg2[%c1, %c0_3] : memref<2x128xf32, #tpu.memory_space<vmem>>, vector<1x128xf32>
    %8 = vector.broadcast %2 : vector<64x1xf32> to vector<64x128xf32>
    %9 = vector.broadcast %7 : vector<1x128xf32> to vector<64x128xf32>
    %10 = arith.mulf %8, %9 : vector<64x128xf32>
    %11 = arith.addf %6, %10 : vector<64x128xf32>
    %cst = arith.constant 5.000000e-01 : f32
    %12 = vector.broadcast %cst : f32 to vector<64x128xf32>
    %13 = arith.addf %11, %12 : vector<64x128xf32>
    %14 = math.floor %13 : vector<64x128xf32>
    %15 = arith.subf %11, %14 : vector<64x128xf32>
    %cst_4 = arith.constant 3.14159274 : f32
    %16 = vector.broadcast %cst_4 : f32 to vector<64x128xf32>
    %17 = arith.mulf %16, %15 : vector<64x128xf32>
    %18 = arith.mulf %17, %17 : vector<64x128xf32>
    %cst_5 = arith.constant 2.75573188E-6 : f32
    %19 = vector.broadcast %cst_5 : f32 to vector<64x128xf32>
    %20 = arith.mulf %18, %19 : vector<64x128xf32>
    %cst_6 = arith.constant -1.98412701E-4 : f32
    %21 = vector.broadcast %cst_6 : f32 to vector<64x128xf32>
    %22 = arith.addf %21, %20 : vector<64x128xf32>
    %23 = arith.mulf %18, %22 : vector<64x128xf32>
    %cst_7 = arith.constant 0.00833333377 : f32
    %24 = vector.broadcast %cst_7 : f32 to vector<64x128xf32>
    %25 = arith.addf %24, %23 : vector<64x128xf32>
    %26 = arith.mulf %18, %25 : vector<64x128xf32>
    %cst_8 = arith.constant -0.166666672 : f32
    %27 = vector.broadcast %cst_8 : f32 to vector<64x128xf32>
    %28 = arith.addf %27, %26 : vector<64x128xf32>
    %29 = arith.mulf %18, %28 : vector<64x128xf32>
    %cst_9 = arith.constant 1.000000e+00 : f32
    %30 = vector.broadcast %cst_9 : f32 to vector<64x128xf32>
    %31 = arith.addf %30, %29 : vector<64x128xf32>
    %32 = arith.mulf %17, %31 : vector<64x128xf32>
    %cst_10 = arith.constant -2.755732E-7 : f32
    %33 = vector.broadcast %cst_10 : f32 to vector<64x128xf32>
    %34 = arith.mulf %18, %33 : vector<64x128xf32>
    %cst_11 = arith.constant 2.48015876E-5 : f32
    %35 = vector.broadcast %cst_11 : f32 to vector<64x128xf32>
    %36 = arith.addf %35, %34 : vector<64x128xf32>
    %37 = arith.mulf %18, %36 : vector<64x128xf32>
    %cst_12 = arith.constant -0.00138888892 : f32
    %38 = vector.broadcast %cst_12 : f32 to vector<64x128xf32>
    %39 = arith.addf %38, %37 : vector<64x128xf32>
    %40 = arith.mulf %18, %39 : vector<64x128xf32>
    %cst_13 = arith.constant 0.0416666679 : f32
    %41 = vector.broadcast %cst_13 : f32 to vector<64x128xf32>
    %42 = arith.addf %41, %40 : vector<64x128xf32>
    %43 = arith.mulf %18, %42 : vector<64x128xf32>
    %cst_14 = arith.constant -5.000000e-01 : f32
    %44 = vector.broadcast %cst_14 : f32 to vector<64x128xf32>
    %45 = arith.addf %44, %43 : vector<64x128xf32>
    %46 = arith.mulf %18, %45 : vector<64x128xf32>
    %cst_15 = arith.constant 1.000000e+00 : f32
    %47 = vector.broadcast %cst_15 : f32 to vector<64x128xf32>
    %48 = arith.addf %47, %46 : vector<64x128xf32>
    %cst_16 = arith.constant 2.000000e+00 : f32
    %49 = vector.broadcast %cst_16 : f32 to vector<64x128xf32>
    %50 = arith.mulf %49, %32 : vector<64x128xf32>
    %51 = arith.mulf %50, %48 : vector<64x128xf32>
    %52 = arith.subf %48, %32 : vector<64x128xf32>
    %53 = arith.addf %48, %32 : vector<64x128xf32>
    %54 = arith.mulf %52, %53 : vector<64x128xf32>
    %c0_17 = arith.constant 0 : index
    %c0_18 = arith.constant 0 : index
    %55 = vector.load %arg3[%c0_17, %c0_18] : memref<64x256xf32, #tpu.memory_space<vmem>>, vector<64x128xf32>
    tpu.vector_store %arg3[%c0_17, %c0_18], %51 {strides = array<i32>} : memref<64x256xf32, #tpu.memory_space<vmem>>, vector<64x128xf32>,
    %c0_19 = arith.constant 0 : index
    %c128 = arith.constant 128 : index
    %56 = vector.load %arg3[%c0_19, %c128] : memref<64x256xf32, #tpu.memory_space<vmem>>, vector<64x128xf32>
    tpu.vector_store %arg3[%c0_19, %c128], %54 {strides = array<i32>} : memref<64x256xf32, #tpu.memory_space<vmem>>, vector<64x128xf32>,
    return
  }
  func.func @transform_0(%arg0: i32) -> (i32, i32) {
    %c0_i32 = arith.constant 0 : i32
    %c0_i32_0 = arith.constant 0 : i32
    return %arg0, %c0_i32 : i32, i32
  }
  func.func @transform_1(%arg0: i32) -> (i32, i32) {
    %c0_i32 = arith.constant 0 : i32
    %c0_i32_0 = arith.constant 0 : i32
    %c0_i32_1 = arith.constant 0 : i32
    return %c0_i32, %c0_i32_0 : i32, i32
  }
  func.func @transform_2(%arg0: i32) -> (i32, i32) {
    %c0_i32 = arith.constant 0 : i32
    %c0_i32_0 = arith.constant 0 : i32
    return %arg0, %c0_i32 : i32, i32
  }
}

</mosaic_0001>

<llo_original>
// kernel: tpu_custom_call.1
$region0: #{tpu_custom_call.1}
  #allocation0 [shape = 'u32[]', space=smem, size = 0x4, offset = 0x4, fixed_abs, tag = 'smem constant byte address 0x4 - core index']
  #allocation1 [shape = 'u32[144,128]{1,0:T(1,128)}', space=vmem, size = 0x12000, scoped, tag = 'internal scratch']
  %s0 = inlined_call_operand.vmem [shape: f32[256,2], index: 0, kind: input, shape index: {}]
  %s1 = inlined_call_operand.vmem [shape: f32[2,128], index: 1, kind: input, shape index: {}]
  %s2 = inlined_call_operand.hbm [shape: f32[256,256], index: 2, kind: output, shape index: {}]
  %s3 = sld [smem:[#allocation0]]
  $region41: #{tpu_custom_call.1} parent=0
    _
  %s5 = ssub.s32 1, %s3
  %s6 = scalar_select 0, %s5, %s3
  $region1: #{tpu_custom_call.1} parent=0
    #allocation2 [shape = 'u8[131072]{0}', space=vmem, size = 0x20000, scoped, tag = 'output window, operand 0']
    #allocation3 [shape = 's32[2]{0}', space=sflag, size = 0x8, scoped, tag = 'scoped memory for tpu_custom_call.1']
    %7 = vsyncpa [#allocation3], 0
    %s8 = scalar_lea.sflag [#allocation3], 1
    %9 = vsyncpa %s8, 0
    loop: start=0, step=1, limit=6
    $region2: #{tpu_custom_call.1} parent=1 // loop_pre_header
      _
    $region3: #{tpu_custom_call.1} parent=1 // loop_header
      %s11 = sphi 0, %s15
      %p12 = scmp.ge.s32.totalorder %s11, 6
      %s21 = sphi 0, %s23
      %s24 = sphi 0, %s21
      %s25 = sphi 0, %s24
      %s41 = sphi 0, %s25
      %s45 = sphi 0, %s45
      %s47 = sphi 0, %s45
      %s48 = sphi 0, %s47
      %s62 = sphi 0, %s48
      %s68 = sphi 0, %s70
      %s71 = sphi 0, %s68
      %s72 = sphi 0, %s71
      %s88 = sphi 0, %s72
    $region4: #{tpu_custom_call.1} parent=1 // loop_header_branch
      %14 = sbr.rel (%p12) target = $region8
    $region5: #{tpu_custom_call.1} parent=1 // loop_body
      %s16 = ssub.s32 %s11, 1
      %s17 = ssub.s32 %s11, 2
      %s18 = sadd.s32 %s11, 1
      %s19 = ssub.s32 %s11, %s18
      %p20 = scmp.eq.s32.totalorder %s19, 0
      %s22 = sadd.s32 %s21, 1
      %s23 = scalar_select %p20, %s21, %s22
      %p26 = pneg %p20
      %p27 = scmp.eq.s32.totalorder %s11, 3
      %p28 = por %p26, %p27
      %p29 = scmp.ne.s32.totalorder %s21, %s24
      %p30 = scmp.eq.s32.totalorder %s11, 0
      %p31 = por %p29, %p30
      %p32 = scmp.ne.s32.totalorder %s21, %s24
      %p33 = scmp.eq.s32.totalorder %s16, 3
      %p34 = por %p32, %p33
      %p35 = scmp.ne.s32.totalorder %s24, %s25
      %p36 = scmp.eq.s32.totalorder %s16, 0
      %p37 = por %p35, %p36
      %p38 = scmp.ne.s32.totalorder %s24, %s25
      %p39 = scmp.eq.s32.totalorder %s17, 3
      %p40 = por %p38, %p39
      %p42 = scmp.ne.s32.totalorder %s25, %s41
      %p43 = scmp.eq.s32.totalorder %s17, 0
      %p44 = por %p42, %p43
      %s46 = sadd.s32 %s45, 1
      %p49 = scmp.eq.s32.totalorder %s11, 3
      %p50 = scmp.ne.s32.totalorder %s45, %s47
      %p51 = scmp.eq.s32.totalorder %s11, 0
      %p52 = por %p50, %p51
      %p53 = scmp.ne.s32.totalorder %s45, %s47
      %p54 = scmp.eq.s32.totalorder %s16, 3
      %p55 = por %p53, %p54
      %p56 = scmp.ne.s32.totalorder %s47, %s48
      %p57 = scmp.eq.s32.totalorder %s16, 0
      %p58 = por %p56, %p57
      %p59 = scmp.ne.s32.totalorder %s47, %s48
      %p60 = scmp.eq.s32.totalorder %s17, 3
      %p61 = por %p59, %p60
      %p63 = scmp.ne.s32.totalorder %s48, %s62
      %p64 = scmp.eq.s32.totalorder %s17, 0
      %p65 = por %p63, %p64
      %s66 = ssub.s32 %s11, %s18
      %p67 = scmp.eq.s32.totalorder %s66, 0
      %s69 = sadd.s32 %s68, 1
      %s70 = scalar_select %p67, %s68, %s69
      %p73 = pneg %p67
      %p74 = scmp.eq.s32.totalorder %s11, 3
      %p75 = por %p73, %p74
      %p76 = scmp.ne.s32.totalorder %s68, %s71
      %p77 = scmp.eq.s32.totalorder %s11, 0
      %p78 = por %p76, %p77
      %p79 = scmp.ne.s32.totalorder %s68, %s71
      %p80 = scmp.eq.s32.totalorder %s16, 3
      %p81 = por %p79, %p80
      %p82 = scmp.ne.s32.totalorder %s71, %s72
      %p83 = scmp.eq.s32.totalorder %s16, 0
      %p84 = por %p82, %p83
      %p85 = scmp.ne.s32.totalorder %s71, %s72
      %p86 = scmp.eq.s32.totalorder %s17, 3
      %p87 = por %p85, %p86
      %p89 = scmp.ne.s32.totalorder %s72, %s88
      %p90 = scmp.eq.s32.totalorder %s17, 0
      %p91 = por %p89, %p90
      %p92 = scmp.le.s32.totalorder 1, %s11
      %p93 = scmp.lt.s32.totalorder %s11, 5
      %p94 = pnand %p92, %p93
      %p95 = pneg %p94
      // Predicated region
      $region9: #{tpu_custom_call.1} parent=5 // pred_check
        _
      $region10: #{tpu_custom_call.1} parent=5 // pred_check_branch
        %97 = sbr.rel (%p94) target = $region12
      $region11: #{tpu_custom_call.1} parent=5 // pred_region
        %s98 = ssub.s32 %s11, 1
        // Predicated region
        $region13: #{tpu_custom_call.1} parent=11 // pred_check
          %p99 = pneg %p58
        $region14: #{tpu_custom_call.1} parent=11 // pred_check_branch
          %101 = sbr.rel (%p99) target = $region16
        $region15: #{tpu_custom_call.1} parent=11 // pred_region
          _
        $region16: #{tpu_custom_call.1} parent=11 // pred_fallthru
          _
      $region12: #{tpu_custom_call.1} parent=5 // pred_fallthru
        _
      %p102 = scmp.lt.s32.totalorder %s11, 4
      // Predicated region
      $region17: #{tpu_custom_call.1} parent=5 // pred_check
        %p103 = pneg %p102
      $region18: #{tpu_custom_call.1} parent=5 // pred_check_branch
        %105 = sbr.rel (%p103) target = $region20
      $region19: #{tpu_custom_call.1} parent=5 // pred_region
        // Predicated region
        $region21: #{tpu_custom_call.1} parent=19 // pred_check
          %p106 = pneg %p31
        $region22: #{tpu_custom_call.1} parent=19 // pred_check_branch
          %108 = sbr.rel (%p106) target = $region24
        $region23: #{tpu_custom_call.1} parent=19 // pred_region
          %s109 = smul.u32 8, %s11
          %p110 = scmp.lt.s32.totalorder %s109, 31
          %s111 = scalar_select %p110, %s109, 31
          %s112 = smul.addr %s111, 8
          %s113 = scalar_lea.vmem %s0, %s112
          %s114 = smul.u32 8, %s11
        $region24: #{tpu_custom_call.1} parent=19 // pred_fallthru
          _
      $region20: #{tpu_custom_call.1} parent=5 // pred_fallthru
        _
      %p115 = scmp.le.s32.totalorder 1, %s11
      %p116 = scmp.lt.s32.totalorder %s11, 5
      %p117 = pnand %p115, %p116
      %p118 = pneg %p117
      // Predicated region
      $region25: #{tpu_custom_call.1} parent=5 // pred_check
        _
      $region26: #{tpu_custom_call.1} parent=5 // pred_check_branch
        %120 = sbr.rel (%p117) target = $region28
      $region27: #{tpu_custom_call.1} parent=5 // pred_region
        %s121 = ssub.s32 %s11, 1
        %s122 = smul.u32 8, %s16
        %p123 = scmp.lt.s32.totalorder %s122, 31
        %s124 = scalar_select %p123, %s122, 31
        %s125 = smul.addr %s124, 8
        %s126 = scalar_lea.vmem %s0, %s125
        %p127 = pneg %p37
        %p128 = pneg %p34
        %p129 = pneg %p58
        %p130 = pneg %p55
        %p131 = pneg %p84
        %p132 = pneg %p81
        %s133 = sand.u32 %s71, 1
        %s134 = scalar_lea.sflag [#allocation3], %s133
        %s135 = sand.u32 %s71, 1
        %s136 = smul.addr %s135, 128
        %s137 = scalar_lea.vmem [#allocation2], %s136
        %s138 = smul.u32 8, %s16
        %p139 = scmp.lt.s32.totalorder %s138, 31
        %s140 = scalar_select %p139, %s138, 31
        %s141 = smul.addr %s140, 8
        %s142 = scalar_lea.vmem %s0, %s141
        %s143 = smul.u32 8, %s16
        %s144 = smul.u32 8, %s16
        %v145 = vld [vmem:[%s142] sm:$0xff]
        %v146 = vld [vmem:[%s142 + $0x8] sm:$0xff]
        %v147 = vld [vmem:[%s142 + $0x10] sm:$0xff]
        %v148 = vld [vmem:[%s142 + $0x18] sm:$0xff]
        %v149 = vld [vmem:[%s142 + $0x20] sm:$0xff]
        %v150 = vld [vmem:[%s142 + $0x28] sm:$0xff]
        %v151 = vld [vmem:[%s142 + $0x30] sm:$0xff]
        %v152 = vld [vmem:[%s142 + $0x38] sm:$0xff]
        %v153 = vld [vmem:[%s1] sm:$0x1]
        %155 = vset.pattern.permute.xlu0 0
        %156 = vperm.xlu0 %155, %v145
        %v157 = vpop.permute.xlu0 %156
        %160 = vset.pattern.permute.xlu0 0
        %161 = vperm.xlu0 %160, %v146
        %v162 = vpop.permute.xlu0 %161
        %165 = vset.pattern.permute.xlu0 0
        %166 = vperm.xlu0 %165, %v147
        %v167 = vpop.permute.xlu0 %166
        %170 = vset.pattern.permute.xlu0 0
        %171 = vperm.xlu0 %170, %v148
        %v172 = vpop.permute.xlu0 %171
        %175 = vset.pattern.permute.xlu0 0
        %176 = vperm.xlu0 %175, %v149
        %v177 = vpop.permute.xlu0 %176
        %180 = vset.pattern.permute.xlu0 0
        %181 = vperm.xlu0 %180, %v150
        %v182 = vpop.permute.xlu0 %181
        %185 = vset.pattern.permute.xlu0 0
        %186 = vperm.xlu0 %185, %v151
        %v187 = vpop.permute.xlu0 %186
        %190 = vset.pattern.permute.xlu0 0
        %191 = vperm.xlu0 %190, %v152
        %v192 = vpop.permute.xlu0 %191
        %v194 = vlaneseq
        %v195 = vshrl.u32 %v194, 7
        %v196 = vsub.s32 0, %v195
        %v197 = vrot.slane %v153, %v196
        %v198 = vmul.f32 %v157, %v197
        %v199 = vmul.f32 %v162, %v197
        %v200 = vmul.f32 %v167, %v197
        %v201 = vmul.f32 %v172, %v197
        %v202 = vmul.f32 %v177, %v197
        %v203 = vmul.f32 %v182, %v197
        %v204 = vmul.f32 %v187, %v197
        %v205 = vmul.f32 %v192, %v197
        %v206 = vld [vmem:[%s1 + $0x1] sm:$0x1]
        %207 = vset.pattern.permute.xlu0 1
        %208 = vperm.xlu0 %207, %v145
        %v209 = vpop.permute.xlu0 %208
        %211 = vset.pattern.permute.xlu0 1
        %212 = vperm.xlu0 %211, %v146
        %v213 = vpop.permute.xlu0 %212
        %215 = vset.pattern.permute.xlu0 1
        %216 = vperm.xlu0 %215, %v147
        %v217 = vpop.permute.xlu0 %216
        %219 = vset.pattern.permute.xlu0 1
        %220 = vperm.xlu0 %219, %v148
        %v221 = vpop.permute.xlu0 %220
        %223 = vset.pattern.permute.xlu0 1
        %224 = vperm.xlu0 %223, %v149
        %v225 = vpop.permute.xlu0 %224
        %227 = vset.pattern.permute.xlu0 1
        %228 = vperm.xlu0 %227, %v150
        %v229 = vpop.permute.xlu0 %228
        %231 = vset.pattern.permute.xlu0 1
        %232 = vperm.xlu0 %231, %v151
        %v233 = vpop.permute.xlu0 %232
        %235 = vset.pattern.permute.xlu0 1
        %236 = vperm.xlu0 %235, %v152
        %v237 = vpop.permute.xlu0 %236
        %v239 = vlaneseq
        %v240 = vshrl.u32 %v239, 7
        %v241 = vsub.s32 0, %v240
        %v242 = vrot.slane %v206, %v241
        %v243 = vmul.f32 %v209, %v242
        %v244 = vmul.f32 %v213, %v242
        %v245 = vmul.f32 %v217, %v242
        %v246 = vmul.f32 %v221, %v242
        %v247 = vmul.f32 %v225, %v242
        %v248 = vmul.f32 %v229, %v242
        %v249 = vmul.f32 %v233, %v242
        %v250 = vmul.f32 %v237, %v242
        %v251 = vadd.f32 %v198, %v243
        %v252 = vadd.f32 %v199, %v244
        %v253 = vadd.f32 %v200, %v245
        %v254 = vadd.f32 %v201, %v246
        %v255 = vadd.f32 %v202, %v247
        %v256 = vadd.f32 %v203, %v248
        %v257 = vadd.f32 %v204, %v249
        %v258 = vadd.f32 %v205, %v250
        %v259 = vadd.f32 %v251, 0.5
        %v260 = vadd.f32 %v252, 0.5
        %v261 = vadd.f32 %v253, 0.5
        %v262 = vadd.f32 %v254, 0.5
        %v263 = vadd.f32 %v255, 0.5
        %v264 = vadd.f32 %v256, 0.5
        %v265 = vadd.f32 %v257, 0.5
        %v266 = vadd.f32 %v258, 0.5
        %v267 = vfloor.f32 %v259
        %v268 = vfloor.f32 %v260
        %v269 = vfloor.f32 %v261
        %v270 = vfloor.f32 %v262
        %v271 = vfloor.f32 %v263
        %v272 = vfloor.f32 %v264
        %v273 = vfloor.f32 %v265
        %v274 = vfloor.f32 %v266
        %v275 = vsub.f32 %v251, %v267
        %v276 = vsub.f32 %v252, %v268
        %v277 = vsub.f32 %v253, %v269
        %v278 = vsub.f32 %v254, %v270
        %v279 = vsub.f32 %v255, %v271
        %v280 = vsub.f32 %v256, %v272
        %v281 = vsub.f32 %v257, %v273
        %v282 = vsub.f32 %v258, %v274
        %v283 = vmul.f32 %v275, 3.1415927
        %v284 = vmul.f32 %v276, 3.1415927
        %v285 = vmul.f32 %v277, 3.1415927
        %v286 = vmul.f32 %v278, 3.1415927
        %v287 = vmul.f32 %v279, 3.1415927
        %v288 = vmul.f32 %v280, 3.1415927
        %v289 = vmul.f32 %v281, 3.1415927
        %v290 = vmul.f32 %v282, 3.1415927
        %v291 = vmul.f32 %v283, %v283
        %v292 = vmul.f32 %v284, %v284
        %v293 = vmul.f32 %v285, %v285
        %v294 = vmul.f32 %v286, %v286
        %v295 = vmul.f32 %v287, %v287
        %v296 = vmul.f32 %v288, %v288
        %v297 = vmul.f32 %v289, %v289
        %v298 = vmul.f32 %v290, %v290
        %v299 = vmul.f32 %v291, 2.7557319e-06
        %v300 = vmul.f32 %v292, 2.7557319e-06
        %v301 = vmul.f32 %v293, 2.7557319e-06
        %v302 = vmul.f32 %v294, 2.7557319e-06
        %v303 = vmul.f32 %v295, 2.7557319e-06
        %v304 = vmul.f32 %v296, 2.7557319e-06
        %v305 = vmul.f32 %v297, 2.7557319e-06
        %v306 = vmul.f32 %v298, 2.7557319e-06
        %v307 = vadd.f32 %v299, -0.0001984127
        %v308 = vadd.f32 %v300, -0.0001984127
        %v309 = vadd.f32 %v301, -0.0001984127
        %v310 = vadd.f32 %v302, -0.0001984127
        %v311 = vadd.f32 %v303, -0.0001984127
        %v312 = vadd.f32 %v304, -0.0001984127
        %v313 = vadd.f32 %v305, -0.0001984127
        %v314 = vadd.f32 %v306, -0.0001984127
        %v315 = vmul.f32 %v291, %v307
        %v316 = vmul.f32 %v292, %v308
        %v317 = vmul.f32 %v293, %v309
        %v318 = vmul.f32 %v294, %v310
        %v319 = vmul.f32 %v295, %v311
        %v320 = vmul.f32 %v296, %v312
        %v321 = vmul.f32 %v297, %v313
        %v322 = vmul.f32 %v298, %v314
        %v323 = vadd.f32 %v315, 0.008333334
        %v324 = vadd.f32 %v316, 0.008333334
        %v325 = vadd.f32 %v317, 0.008333334
        %v326 = vadd.f32 %v318, 0.008333334
        %v327 = vadd.f32 %v319, 0.008333334
        %v328 = vadd.f32 %v320, 0.008333334
        %v329 = vadd.f32 %v321, 0.008333334
        %v330 = vadd.f32 %v322, 0.008333334
        %v331 = vmul.f32 %v291, %v323
        %v332 = vmul.f32 %v292, %v324
        %v333 = vmul.f32 %v293, %v325
        %v334 = vmul.f32 %v294, %v326
        %v335 = vmul.f32 %v295, %v327
        %v336 = vmul.f32 %v296, %v328
        %v337 = vmul.f32 %v297, %v329
        %v338 = vmul.f32 %v298, %v330
        %v339 = vadd.f32 %v331, -0.16666667
        %v340 = vadd.f32 %v332, -0.16666667
        %v341 = vadd.f32 %v333, -0.16666667
        %v342 = vadd.f32 %v334, -0.16666667
        %v343 = vadd.f32 %v335, -0.16666667
        %v344 = vadd.f32 %v336, -0.16666667
        %v345 = vadd.f32 %v337, -0.16666667
        %v346 = vadd.f32 %v338, -0.16666667
        %v347 = vmul.f32 %v291, %v339
        %v348 = vmul.f32 %v292, %v340
        %v349 = vmul.f32 %v293, %v341
        %v350 = vmul.f32 %v294, %v342
        %v351 = vmul.f32 %v295, %v343
        %v352 = vmul.f32 %v296, %v344
        %v353 = vmul.f32 %v297, %v345
        %v354 = vmul.f32 %v298, %v346
        %v355 = vadd.f32 %v347, 1.0
        %v356 = vadd.f32 %v348, 1.0
        %v357 = vadd.f32 %v349, 1.0
        %v358 = vadd.f32 %v350, 1.0
        %v359 = vadd.f32 %v351, 1.0
        %v360 = vadd.f32 %v352, 1.0
        %v361 = vadd.f32 %v353, 1.0
        %v362 = vadd.f32 %v354, 1.0
        %v363 = vmul.f32 %v283, %v355
        %v364 = vmul.f32 %v284, %v356
        %v365 = vmul.f32 %v285, %v357
        %v366 = vmul.f32 %v286, %v358
        %v367 = vmul.f32 %v287, %v359
        %v368 = vmul.f32 %v288, %v360
        %v369 = vmul.f32 %v289, %v361
        %v370 = vmul.f32 %v290, %v362
        %v371 = vmul.f32 %v291, -2.755732e-07
        %v372 = vmul.f32 %v292, -2.755732e-07
        %v373 = vmul.f32 %v293, -2.755732e-07
        %v374 = vmul.f32 %v294, -2.755732e-07
        %v375 = vmul.f32 %v295, -2.755732e-07
        %v376 = vmul.f32 %v296, -2.755732e-07
        %v377 = vmul.f32 %v297, -2.755732e-07
        %v378 = vmul.f32 %v298, -2.755732e-07
        %v379 = vadd.f32 %v371, 2.4801588e-05
        %v380 = vadd.f32 %v372, 2.4801588e-05
        %v381 = vadd.f32 %v373, 2.4801588e-05
        %v382 = vadd.f32 %v374, 2.4801588e-05
        %v383 = vadd.f32 %v375, 2.4801588e-05
        %v384 = vadd.f32 %v376, 2.4801588e-05
        %v385 = vadd.f32 %v377, 2.4801588e-05
        %v386 = vadd.f32 %v378, 2.4801588e-05
        %v387 = vmul.f32 %v291, %v379
        %v388 = vmul.f32 %v292, %v380
        %v389 = vmul.f32 %v293, %v381
        %v390 = vmul.f32 %v294, %v382
        %v391 = vmul.f32 %v295, %v383
        %v392 = vmul.f32 %v296, %v384
        %v393 = vmul.f32 %v297, %v385
        %v394 = vmul.f32 %v298, %v386
        %v395 = vadd.f32 %v387, -0.0013888889
        %v396 = vadd.f32 %v388, -0.0013888889
        %v397 = vadd.f32 %v389, -0.0013888889
        %v398 = vadd.f32 %v390, -0.0013888889
        %v399 = vadd.f32 %v391, -0.0013888889
        %v400 = vadd.f32 %v392, -0.0013888889
        %v401 = vadd.f32 %v393, -0.0013888889
        %v402 = vadd.f32 %v394, -0.0013888889
        %v403 = vmul.f32 %v291, %v395
        %v404 = vmul.f32 %v292, %v396
        %v405 = vmul.f32 %v293, %v397
        %v406 = vmul.f32 %v294, %v398
        %v407 = vmul.f32 %v295, %v399
        %v408 = vmul.f32 %v296, %v400
        %v409 = vmul.f32 %v297, %v401
        %v410 = vmul.f32 %v298, %v402
        %v411 = vadd.f32 %v403, 0.041666668
        %v412 = vadd.f32 %v404, 0.041666668
        %v413 = vadd.f32 %v405, 0.041666668
        %v414 = vadd.f32 %v406, 0.041666668
        %v415 = vadd.f32 %v407, 0.041666668
        %v416 = vadd.f32 %v408, 0.041666668
        %v417 = vadd.f32 %v409, 0.041666668
        %v418 = vadd.f32 %v410, 0.041666668
        %v419 = vmul.f32 %v291, %v411
        %v420 = vmul.f32 %v292, %v412
        %v421 = vmul.f32 %v293, %v413
        %v422 = vmul.f32 %v294, %v414
        %v423 = vmul.f32 %v295, %v415
        %v424 = vmul.f32 %v296, %v416
        %v425 = vmul.f32 %v297, %v417
        %v426 = vmul.f32 %v298, %v418
        %v427 = vadd.f32 %v419, -0.5
        %v428 = vadd.f32 %v420, -0.5
        %v429 = vadd.f32 %v421, -0.5
        %v430 = vadd.f32 %v422, -0.5
        %v431 = vadd.f32 %v423, -0.5
        %v432 = vadd.f32 %v424, -0.5
        %v433 = vadd.f32 %v425, -0.5
        %v434 = vadd.f32 %v426, -0.5
        %v435 = vmul.f32 %v291, %v427
        %v436 = vmul.f32 %v292, %v428
        %v437 = vmul.f32 %v293, %v429
        %v438 = vmul.f32 %v294, %v430
        %v439 = vmul.f32 %v295, %v431
        %v440 = vmul.f32 %v296, %v432
        %v441 = vmul.f32 %v297, %v433
        %v442 = vmul.f32 %v298, %v434
        %v443 = vadd.f32 %v435, 1.0
        %v444 = vadd.f32 %v436, 1.0
        %v445 = vadd.f32 %v437, 1.0
        %v446 = vadd.f32 %v438, 1.0
        %v447 = vadd.f32 %v439, 1.0
        %v448 = vadd.f32 %v440, 1.0
        %v449 = vadd.f32 %v441, 1.0
        %v450 = vadd.f32 %v442, 1.0
        %v451 = vmul.f32 %v363, 2.0
        %v452 = vmul.f32 %v364, 2.0
        %v453 = vmul.f32 %v365, 2.0
        %v454 = vmul.f32 %v366, 2.0
        %v455 = vmul.f32 %v367, 2.0
        %v456 = vmul.f32 %v368, 2.0
        %v457 = vmul.f32 %v369, 2.0
        %v458 = vmul.f32 %v370, 2.0
        %v459 = vmul.f32 %v451, %v443
        %v460 = vmul.f32 %v452, %v444
        %v461 = vmul.f32 %v453, %v445
        %v462 = vmul.f32 %v454, %v446
        %v463 = vmul.f32 %v455, %v447
        %v464 = vmul.f32 %v456, %v448
        %v465 = vmul.f32 %v457, %v449
        %v466 = vmul.f32 %v458, %v450
        %v467 = vsub.f32 %v443, %v363
        %v468 = vsub.f32 %v444, %v364
        %v469 = vsub.f32 %v445, %v365
        %v470 = vsub.f32 %v446, %v366
        %v471 = vsub.f32 %v447, %v367
        %v472 = vsub.f32 %v448, %v368
        %v473 = vsub.f32 %v449, %v369
        %v474 = vsub.f32 %v450, %v370
        %v475 = vadd.f32 %v443, %v363
        %v476 = vadd.f32 %v444, %v364
        %v477 = vadd.f32 %v445, %v365
        %v478 = vadd.f32 %v446, %v366
        %v479 = vadd.f32 %v447, %v367
        %v480 = vadd.f32 %v448, %v368
        %v481 = vadd.f32 %v449, %v369
        %v482 = vadd.f32 %v450, %v370
        %v483 = vmul.f32 %v467, %v475
        %v484 = vmul.f32 %v468, %v476
        %v485 = vmul.f32 %v469, %v477
        %v486 = vmul.f32 %v470, %v478
        %v487 = vmul.f32 %v471, %v479
        %v488 = vmul.f32 %v472, %v480
        %v489 = vmul.f32 %v473, %v481
        %v490 = vmul.f32 %v474, %v482
        %491 = vst [vmem:[%s137] sm:$0xff] %v459
        %492 = vst [vmem:[%s137 + $0x10] sm:$0xff] %v460
        %493 = vst [vmem:[%s137 + $0x20] sm:$0xff] %v461
        %494 = vst [vmem:[%s137 + $0x30] sm:$0xff] %v462
        %495 = vst [vmem:[%s137 + $0x40] sm:$0xff] %v463
        %496 = vst [vmem:[%s137 + $0x50] sm:$0xff] %v464
        %497 = vst [vmem:[%s137 + $0x60] sm:$0xff] %v465
        %498 = vst [vmem:[%s137 + $0x70] sm:$0xff] %v466
        %499 = vst [vmem:[%s137 + $0x8] sm:$0xff] %v483
        %500 = vst [vmem:[%s137 + $0x18] sm:$0xff] %v484
        %501 = vst [vmem:[%s137 + $0x28] sm:$0xff] %v485
        %502 = vst [vmem:[%s137 + $0x38] sm:$0xff] %v486
        %503 = vst [vmem:[%s137 + $0x48] sm:$0xff] %v487
        %504 = vst [vmem:[%s137 + $0x58] sm:$0xff] %v488
        %505 = vst [vmem:[%s137 + $0x68] sm:$0xff] %v489
        %506 = vst [vmem:[%s137 + $0x78] sm:$0xff] %v490
        %s507 = sand.u32 %s71, 1
        %s508 = scalar_lea.sflag [#allocation3], %s507
        %s509 = sand.u32 %s71, 1
        %s510 = smul.addr %s509, 128
        %s511 = scalar_lea.vmem [#allocation2], %s510
        // Predicated region
        $region29: #{tpu_custom_call.1} parent=27 // pred_check
          %p512 = pneg %p81
        $region30: #{tpu_custom_call.1} parent=27 // pred_check_branch
          %514 = sbr.rel (%p512) target = $region32
        $region31: #{tpu_custom_call.1} parent=27 // pred_region
          %s515 = smul.u32 8, %s16
          %s517 = ssub.s32 2048, 2048
          %518 = vsyncadd %s508, %s517
          %s519 = smul.addr %s515, 2
          %s520 = smul.addr %s519, 128
          %s521 = scalar_lea.hbm %s2, %s520
          %s522 = sshll.u32 %s511, 4
          %s523 = int_to_ptr.vmem [resolvable:$true] %s522
          %528 = dma.vmem_to_hbm [thread:$0]  %s523, 2048, %s521, %s508, 256, 256, 16
        $region32: #{tpu_custom_call.1} parent=27 // pred_fallthru
          _
      $region28: #{tpu_custom_call.1} parent=5 // pred_fallthru
        _
      %p529 = scmp.le.s32.totalorder 2, %s11
      // Predicated region
      $region33: #{tpu_custom_call.1} parent=5 // pred_check
        %p530 = pneg %p529
      $region34: #{tpu_custom_call.1} parent=5 // pred_check_branch
        %532 = sbr.rel (%p530) target = $region36
      $region35: #{tpu_custom_call.1} parent=5 // pred_region
        %s533 = ssub.s32 %s11, 2
        // Predicated region
        $region37: #{tpu_custom_call.1} parent=35 // pred_check
          %p534 = pneg %p87
        $region38: #{tpu_custom_call.1} parent=35 // pred_check_branch
          %536 = sbr.rel (%p534) target = $region40
        $region39: #{tpu_custom_call.1} parent=35 // pred_region
          %s537 = sand.u32 %s72, 1
          %s538 = scalar_lea.sflag [#allocation3], %s537
          %s539 = sand.u32 %s72, 1
          %s540 = smul.addr %s539, 128
          %s541 = scalar_lea.vmem [#allocation2], %s540
          %542 = dma.done %s538, 2048
        $region40: #{tpu_custom_call.1} parent=35 // pred_fallthru
          _
      $region36: #{tpu_custom_call.1} parent=5 // pred_fallthru
        _
    $region6: #{tpu_custom_call.1} parent=1 // loop_footer
      %s15 = sadd.s32 1, %s11
    $region7: #{tpu_custom_call.1} parent=1 // loop_footer_branch
      %10 = sbr.rel target = $region3
    $region8: #{tpu_custom_call.1} parent=1 // loop_exit
      _
    %543 = vsyncpa [#allocation3], 1
    %s544 = scalar_lea.sflag [#allocation3], 1
    %545 = vsyncpa %s544, 1

</llo_original>
